<compile_context>
chip_gen: v7x
topology: tpu7x:2x2x1
jax: 0.10.0
libtpu: 0.0.40
codegen_flags: <defaults>
</compile_context>

<pallas_src>
import functools

import jax
import jax.numpy as jnp
from jax.experimental import pallas as pl
from jax.experimental.pallas import tpu as pltpu


def _round_up(x, m):
    return (x + m - 1) // m * m


def _cdiv(a, b):
    return (a + b - 1) // b


_VMEM_CAPACITY = None


def _vmem_capacity_bytes():
    """Per-core VMEM capacity; conservative 64 MiB (v7x) fallback."""
    global _VMEM_CAPACITY
    if _VMEM_CAPACITY is None:
        try:
            _VMEM_CAPACITY = int(pltpu.get_tpu_info().vmem_capacity_bytes)
        except Exception:  # noqa: BLE001 - any failure -> conservative default
            _VMEM_CAPACITY = 64 * 1024 * 1024
    return _VMEM_CAPACITY


def _vmem_estimate(tr, tf, d_model, compute_bytes, out_bytes, use_scratch):
    """Generous VMEM-bytes estimate for one grid step (double-buffered I/O)."""
    x_tile = 2 * tr * d_model * compute_bytes
    w1_tile = 2 * d_model * tf * compute_bytes
    w2_tile = 2 * tf * d_model * compute_bytes
    out_tile = 2 * tr * d_model * out_bytes
    biases = 2 * 8 * (tf + d_model) * 4          # f32, sublane-padded
    acc = tr * d_model * 4 if use_scratch else 0
    h_tmp = 3 * tr * tf * 4                      # f32 h + GELU temporaries
    return x_tile + w1_tile + w2_tile + out_tile + biases + acc + h_tmp


def _ffn_kernel(x_ref, w1_ref, b1_ref, w2_ref, b2_ref, o_ref, *scratch,
                gelu_dtype, use_scratch):
    # Grid: (row tiles ["parallel"], d_ff tiles ["arbitrary" reduction]).
    #   x_ref:  (TR, d_model)    resident across k
    #   w1_ref: (d_model, TF)    b1_ref: (1, TF)       (f32)
    #   w2_ref: (TF, d_model)    b2_ref: (1, d_model)  (f32)
    #   o_ref:  (TR, d_model)    doubles as the f32 accumulator if no scratch
    acc_ref = scratch[0] if use_scratch else o_ref
    k = pl.program_id(1)

    @pl.when(k == 0)
    def _():
        # Seed the accumulator with the output bias -> no final bias add.
        acc_ref[...] = jnp.broadcast_to(
            b2_ref[...].astype(acc_ref.dtype), acc_ref.shape)

    # First linear slab (MXU), f32 accumulation, + bias (f32).
    h = jnp.dot(x_ref[...], w1_ref[...], preferred_element_type=jnp.float32)
    h = h + b1_ref[...]

    # GELU, tanh approximation.  On v6e/v7x the polynomial runs in the compute
    # dtype (bf16 VPU / EUP); tanh uses the EUP slot and overlaps the MXU.
    h = h.astype(gelu_dtype)
    c = 0.7978845608028654  # sqrt(2 / pi)
    inner = (c * h) * (1.0 + 0.044715 * (h * h))
    h = 0.5 * h * (1.0 + jnp.tanh(inner))

    # TODO(synk): training-mode dropout (pltpu.prng_random_bits mask) is not
    # emitted; nn.Dropout is the identity in eval mode.

    # Second linear slab (MXU), accumulated over the d_ff tiles.
    acc_ref[...] += jnp.dot(h.astype(w2_ref.dtype), w2_ref[...],
                            preferred_element_type=jnp.float32)

    if use_scratch:
        @pl.when(k == pl.num_programs(1) - 1)
        def _():
            o_ref[...] = acc_ref[...].astype(o_ref.dtype)


@functools.partial(
    jax.jit,
    static_argnames=("tile_rows", "tile_ff", "compute_dtype",
                     "gelu_in_compute_dtype", "full_weight_residency"))
def positionwise_feed_forward(x, w1, b1, w2, b2, *, tile_rows=512,
                              tile_ff=2048, compute_dtype=None,
                              gelu_in_compute_dtype=True,
                              full_weight_residency=None):
    """x: [batch, seq, d_model] -> [batch, seq, d_model] (caller's dtype).

    w1: [d_model, d_ff], b1: [d_ff], w2: [d_ff, d_model], b2: [d_model].
    compute_dtype=jnp.bfloat16 casts x / W1 / W2 (f32 accumulation kept);
    the output is cast back to x's original dtype.
    Set gelu_in_compute_dtype=False on v5e (no bf16 VPU/EUP).
    full_weight_residency: None = auto (fit-based), True/False = force.
    """
    batch, seq, d_model = x.shape
    d_ff = w1.shape[1]
    n_rows = batch * seq
    out_dtype = x.dtype                      # always return the caller's dtype

    if compute_dtype is not None:
        x = x.astype(compute_dtype)
        w1 = w1.astype(compute_dtype)
        w2 = w2.astype(compute_dtype)
    compute_bytes = jnp.dtype(x.dtype).itemsize
    out_bytes = jnp.dtype(out_dtype).itemsize

    gelu_dtype = (jnp.dtype(compute_dtype)
                  if (compute_dtype is not None and gelu_in_compute_dtype)
                  else jnp.dtype(jnp.float32))

    # float32 outputs double as the accumulator; other dtypes need f32 scratch.
    use_scratch = jnp.dtype(out_dtype) != jnp.dtype(jnp.float32)

    # ---- Row tiling: large tiles, but >=2 tiles so both v7x cores get work.
    tr = max(8, _round_up(min(tile_rows, _round_up(n_rows, 8)), 8))
    if _cdiv(n_rows, tr) < 2 and n_rows > 8:
        tr = _round_up(_cdiv(n_rows, 2), 8)
    padded_rows = _round_up(n_rows, tr)

    # ---- d_ff tiling: prefer full W1/W2 residency (weights DMAed once).
    budget = int(0.85 * _vmem_capacity_bytes())

    def fits(tf_):
        return _vmem_estimate(tr, tf_, d_model, compute_bytes, out_bytes,
                              use_scratch) <= budget

    resident = full_weight_residency
    if resident is None:
        resident = fits(d_ff)
    if resident:
        tf = d_ff
    else:
        tf = max(128, min(_round_up(tile_ff, 128), _round_up(d_ff, 128)))
        while tf > 128 and not fits(tf):
            tf = max(128, _round_up(tf // 2, 128))
    padded_ff = _round_up(d_ff, tf)

    vmem_limit = int(min(
        budget,
        max(32 * 1024 * 1024,
            _vmem_estimate(tr, tf, d_model, compute_bytes, out_bytes,
                           use_scratch) + 4 * 1024 * 1024)))

    # ---- Pad operands (zero-padded d_ff columns/rows contribute exactly 0).
    x2d = x.reshape(n_rows, d_model)
    if padded_rows != n_rows:
        x2d = jnp.pad(x2d, ((0, padded_rows - n_rows), (0, 0)))
    if padded_ff != d_ff:
        w1 = jnp.pad(w1, ((0, 0), (0, padded_ff - d_ff)))
        w2 = jnp.pad(w2, ((0, padded_ff - d_ff), (0, 0)))
        b1 = jnp.pad(b1, (0, padded_ff - d_ff))
    b1_2d = b1.reshape(1, padded_ff).astype(jnp.float32)
    b2_2d = b2.reshape(1, d_model).astype(jnp.float32)

    grid = (padded_rows // tr, padded_ff // tf)

    bound_kernel = functools.partial(_ffn_kernel, gelu_dtype=gelu_dtype,
                                     use_scratch=use_scratch)

    def ffn_kernel(*refs):  # named wrapper (keeps a __name__ for pallas_call)
        bound_kernel(*refs)

    scratch_shapes = ([pltpu.VMEM((tr, d_model), jnp.float32)]
                      if use_scratch else [])

    # NOTE: with tf == padded_ff the W1/W2/b1/b2 index_maps are constant over
    # the whole grid, so Pallas fetches them from HBM exactly once.  On v7x,
    # pl.Buffered(1) on those specs would additionally halve their resident
    # VMEM; default buffering is kept here for portability and accounted for
    # in the VMEM budget above.
    out2d = pl.pallas_call(
        ffn_kernel,
        out_shape=jax.ShapeDtypeStruct((padded_rows, d_model), out_dtype),
        grid_spec=pltpu.PrefetchScalarGridSpec(
            num_scalar_prefetch=0,
            grid=grid,
            in_specs=[
                pl.BlockSpec((tr, d_model), lambda i, k: (i, 0)),   # x rows
                pl.BlockSpec((d_model, tf), lambda i, k: (0, k)),   # W1 slab
                pl.BlockSpec((1, tf), lambda i, k: (0, k)),         # b1 slab
                pl.BlockSpec((tf, d_model), lambda i, k: (k, 0)),   # W2 slab
                pl.BlockSpec((1, d_model), lambda i, k: (0, 0)),    # b2
            ],
            out_specs=pl.BlockSpec((tr, d_model), lambda i, k: (i, 0)),
            scratch_shapes=scratch_shapes,
        ),
        compiler_params=pltpu.CompilerParams(
            dimension_semantics=("parallel", "arbitrary"),
            vmem_limit_bytes=vmem_limit,
        ),
    )(x2d, w1, b1_2d, w2, b2_2d)

    return out2d[:n_rows].reshape(batch, seq, d_model)


def _reference(x, w1, b1, w2, b2):
    h = x @ w1 + b1
    c = 0.7978845608028654
    h = 0.5 * h * (1.0 + jnp.tanh(c * (h + 0.044715 * h ** 3)))
    return h @ w2 + b2


if __name__ == "__main__":
    # Small shapes consistent with the module: batch=2, seq=8, d_model=32, d_ff=128.
    batch, seq, d_model, d_ff = 2, 8, 32, 128

    key = jax.random.PRNGKey(0)
    kx, kw1, kb1, kw2, kb2 = jax.random.split(key, 5)

    x = jax.random.normal(kx, (batch, seq, d_model), dtype=jnp.float32)
    # nn.Linear(d_model, d_ff): weight [d_ff, d_model]; stored transposed here.
    w1 = jax.random.normal(kw1, (d_model, d_ff), dtype=jnp.float32) * 0.05
    b1 = jax.random.normal(kb1, (d_ff,), dtype=jnp.float32) * 0.05
    w2 = jax.random.normal(kw2, (d_ff, d_model), dtype=jnp.float32) * 0.05
    b2 = jax.random.normal(kb2, (d_model,), dtype=jnp.float32) * 0.05

    ref = _reference(x, w1, b1, w2, b2)

    # 1) f32 path, full-weight-residency config (default).
    out = jax.block_until_ready(positionwise_feed_forward(x, w1, b1, w2, b2))
    assert out.shape == (batch, seq, d_model) and out.dtype == x.dtype
    assert jnp.allclose(out, ref, atol=1e-4, rtol=1e-4), "f32 mismatch"

    # 2) bf16 compute path (bf16 GELU on v6e/v7x); output is cast back to f32.
    out_bf16 = jax.block_until_ready(
        positionwise_feed_forward(x, w1, b1, w2, b2,
                                  compute_dtype=jnp.bfloat16))
    assert out_bf16.shape == (batch, seq, d_model) and out_bf16.dtype == x.dtype
    assert jnp.allclose(out_bf16, ref, atol=5e-2, rtol=5e-2), "bf16 mismatch"

    # 3) forced d_ff-reduction path with zero-padded d_ff (covers the
    #    k-accumulation used when the weights do not fit the VMEM budget).
    d_ff2 = 192
    kw1b, kb1b, kw2b = jax.random.split(jax.random.PRNGKey(1), 3)
    w1b = jax.random.normal(kw1b, (d_model, d_ff2), dtype=jnp.float32) * 0.05
    b1b = jax.random.normal(kb1b, (d_ff2,), dtype=jnp.float32) * 0.05
    w2b = jax.random.normal(kw2b, (d_ff2, d_model), dtype=jnp.float32) * 0.05
    ref2 = _reference(x, w1b, b1b, w2b, b2)
    out2 = jax.block_until_ready(
        positionwise_feed_forward(x, w1b, b1b, w2b, b2, tile_ff=128,
                                  full_weight_residency=False))
    assert out2.shape == (batch, seq, d_model)
    assert jnp.allclose(out2, ref2, atol=1e-4, rtol=1e-4), "tiled-d_ff mismatch"

    print("KERNEL_OK")
</pallas_src>

<mosaic_0001>
module attributes {stable_mosaic.version = 11 : i64} {
  func.func @ffn_kernel(%arg0: i32, %arg1: i32, %arg2: memref<8x32xf32, #tpu.memory_space<vmem>>, %arg3: memref<32x128xf32, #tpu.memory_space<vmem>>, %arg4: memref<1x128xf32, #tpu.memory_space<vmem>>, %arg5: memref<128x32xf32, #tpu.memory_space<vmem>>, %arg6: memref<1x32xf32, #tpu.memory_space<vmem>>, %arg7: memref<8x32xf32, #tpu.memory_space<vmem>>) attributes {dimension_semantics = [#tpu.dimension_semantics<parallel>, #tpu.dimension_semantics<arbitrary>], iteration_bounds = array<i64: 2, 1>, scalar_prefetch = 0 : i64, scratch_operands = 0 : i64, tpu.core_type = #tpu.core_type<tc>, window_params = [{transform_indices = @transform_0, window_bounds = array<i64: 8, 32>}, {transform_indices = @transform_1, window_bounds = array<i64: 32, 128>}, {transform_indices = @transform_2, window_bounds = array<i64: 1, 128>}, {transform_indices = @transform_3, window_bounds = array<i64: 128, 32>}, {pipeline_mode = #tpu.pipeline_mode<synchronous>, transform_indices = @transform_4, window_bounds = array<i64: 1, 32>}, {transform_indices = @transform_5, window_bounds = array<i64: 8, 32>}]} {
    %c0_i32 = arith.constant 0 : i32
    %0 = arith.cmpi eq, %arg1, %c0_i32 : i32
    %1 = arith.extui %0 : i1 to i32
    %c0_i32_0 = arith.constant 0 : i32
    %2 = arith.cmpi ne, %1, %c0_i32_0 : i32
    scf.if %2 {
      %c0_18 = arith.constant 0 : index
      %c0_19 = arith.constant 0 : index
      %28 = vector.load %arg6[%c0_18, %c0_19] : memref<1x32xf32, #tpu.memory_space<vmem>>, vector<1x32xf32>
      %29 = vector.shape_cast %28 : vector<1x32xf32> to vector<1x32xf32>
      %30 = vector.broadcast %29 : vector<1x32xf32> to vector<8x32xf32>
      %c0_20 = arith.constant 0 : index
      %c0_21 = arith.constant 0 : index
      %31 = vector.load %arg7[%c0_20, %c0_21] : memref<8x32xf32, #tpu.memory_space<vmem>>, vector<8x32xf32>
      tpu.vector_store %arg7[%c0_20, %c0_21], %30 {strides = array<i32>} : memref<8x32xf32, #tpu.memory_space<vmem>>, vector<8x32xf32>,
    } else {
    }
    %c0 = arith.constant 0 : index
    %c0_1 = arith.constant 0 : index
    %3 = vector.load %arg2[%c0, %c0_1] : memref<8x32xf32, #tpu.memory_space<vmem>>, vector<8x32xf32>
    %c0_2 = arith.constant 0 : index
    %c0_3 = arith.constant 0 : index
    %4 = vector.load %arg3[%c0_2, %c0_3] : memref<32x128xf32, #tpu.memory_space<vmem>>, vector<32x128xf32>
    %cst = arith.constant dense<0.000000e+00> : vector<8x128xf32>
    %5 = tpu.matmul %3, %4, %cst {dimension_numbers = #tpu.dot_dimension_numbers<[1], [0], [0], [1], [0, 0, 1, 1], [], []>} : vector<8x32xf32>, vector<32x128xf32>, vector<8x128xf32> -> vector<8x128xf32>
    %c0_4 = arith.constant 0 : index
    %c0_5 = arith.constant 0 : index
    %6 = vector.load %arg4[%c0_4, %c0_5] : memref<1x128xf32, #tpu.memory_space<vmem>>, vector<1x128xf32>
    %7 = vector.broadcast %6 : vector<1x128xf32> to vector<8x128xf32>
    %8 = arith.addf %5, %7 : vector<8x128xf32>
    %cst_6 = arith.constant 0.797884583 : f32
    %9 = vector.broadcast %cst_6 : f32 to vector<8x128xf32>
    %10 = arith.mulf %9, %8 : vector<8x128xf32>
    %11 = arith.mulf %8, %8 : vector<8x128xf32>
    %cst_7 = arith.constant 4.471500e-02 : f32
    %12 = vector.broadcast %cst_7 : f32 to vector<8x128xf32>
    %13 = arith.mulf %12, %11 : vector<8x128xf32>
    %cst_8 = arith.constant 1.000000e+00 : f32
    %14 = vector.broadcast %cst_8 : f32 to vector<8x128xf32>
    %15 = arith.addf %14, %13 : vector<8x128xf32>
    %16 = arith.mulf %10, %15 : vector<8x128xf32>
    %cst_9 = arith.constant 5.000000e-01 : f32
    %17 = vector.broadcast %cst_9 : f32 to vector<8x128xf32>
    %18 = arith.mulf %17, %8 : vector<8x128xf32>
    %19 = math.tanh %16 : vector<8x128xf32>
    %cst_10 = arith.constant 1.000000e+00 : f32
    %20 = vector.broadcast %cst_10 : f32 to vector<8x128xf32>
    %21 = arith.addf %20, %19 : vector<8x128xf32>
    %22 = arith.mulf %18, %21 : vector<8x128xf32>
    %c0_11 = arith.constant 0 : index
    %c0_12 = arith.constant 0 : index
    %23 = vector.load %arg7[%c0_11, %c0_12] : memref<8x32xf32, #tpu.memory_space<vmem>>, vector<8x32xf32>
    %c0_13 = arith.constant 0 : index
    %c0_14 = arith.constant 0 : index
    %24 = vector.load %arg5[%c0_13, %c0_14] : memref<128x32xf32, #tpu.memory_space<vmem>>, vector<128x32xf32>
    %cst_15 = arith.constant dense<0.000000e+00> : vector<8x32xf32>
    %25 = tpu.matmul %22, %24, %cst_15 {dimension_numbers = #tpu.dot_dimension_numbers<[1], [0], [0], [1], [0, 0, 1, 1], [], []>} : vector<8x128xf32>, vector<128x32xf32>, vector<8x32xf32> -> vector<8x32xf32>
    %26 = arith.addf %23, %25 : vector<8x32xf32>
    %c0_16 = arith.constant 0 : index
    %c0_17 = arith.constant 0 : index
    %27 = vector.load %arg7[%c0_16, %c0_17] : memref<8x32xf32, #tpu.memory_space<vmem>>, vector<8x32xf32>
    tpu.vector_store %arg7[%c0_16, %c0_17], %26 {strides = array<i32>} : memref<8x32xf32, #tpu.memory_space<vmem>>, vector<8x32xf32>,
    return
  }
  func.func @transform_0(%arg0: i32, %arg1: i32) -> (i32, i32) {
    %c0_i32 = arith.constant 0 : i32
    %c0_i32_0 = arith.constant 0 : i32
    return %arg0, %c0_i32 : i32, i32
  }
  func.func @transform_1(%arg0: i32, %arg1: i32) -> (i32, i32) {
    %c0_i32 = arith.constant 0 : i32
    %c0_i32_0 = arith.constant 0 : i32
    return %c0_i32, %arg1 : i32, i32
  }
  func.func @transform_2(%arg0: i32, %arg1: i32) -> (i32, i32) {
    %c0_i32 = arith.constant 0 : i32
    %c0_i32_0 = arith.constant 0 : i32
    return %c0_i32, %arg1 : i32, i32
  }
  func.func @transform_3(%arg0: i32, %arg1: i32) -> (i32, i32) {
    %c0_i32 = arith.constant 0 : i32
    %c0_i32_0 = arith.constant 0 : i32
    return %arg1, %c0_i32 : i32, i32
  }
  func.func @transform_4(%arg0: i32, %arg1: i32) -> (i32, i32) {
    %c0_i32 = arith.constant 0 : i32
    %c0_i32_0 = arith.constant 0 : i32
    %c0_i32_1 = arith.constant 0 : i32
    return %c0_i32, %c0_i32_0 : i32, i32
  }
  func.func @transform_5(%arg0: i32, %arg1: i32) -> (i32, i32) {
    %c0_i32 = arith.constant 0 : i32
    %c0_i32_0 = arith.constant 0 : i32
    return %arg0, %c0_i32 : i32, i32
  }
}

</mosaic_0001>

<llo_original>
// kernel: positionwise_feed_forward.1
$region0: #{positionwise_feed_forward.1}
  #allocation0 [shape = 'u32[]', space=smem, size = 0x4, offset = 0x4, fixed_abs, tag = 'smem constant byte address 0x4 - core index']
  #allocation1 [shape = 'u32[144,128]{1,0:T(1,128)}', space=vmem, size = 0x12000, scoped, tag = 'internal scratch']
  %s0 = inlined_call_operand.vmem [shape: f32[16,32], index: 0, kind: input, shape index: {}]
  %s1 = inlined_call_operand.vmem [shape: f32[32,128], index: 1, kind: input, shape index: {}]
  %s2 = inlined_call_operand.vmem [shape: f32[1,128], index: 2, kind: input, shape index: {}]
  %s3 = inlined_call_operand.vmem [shape: f32[128,32], index: 3, kind: input, shape index: {}]
  %s4 = inlined_call_operand.vmem [shape: f32[1,32], index: 4, kind: input, shape index: {}]
  %s5 = inlined_call_operand.hbm [shape: f32[16,32], index: 5, kind: output, shape index: {}]
  %s6 = sld [smem:[#allocation0]]
  $region57: #{positionwise_feed_forward.1} parent=0
    _
  %s8 = ssub.s32 1, %s6
  %s9 = scalar_select 0, %s8, %s6
  $region1: #{positionwise_feed_forward.1} parent=0
    #allocation2 [shape = 'u8[8192]{0}', space=vmem, size = 0x2000, scoped, tag = 'output window, operand 0']
    #allocation3 [shape = 's32[2]{0}', space=sflag, size = 0x8, scoped, tag = 'scoped memory for positionwise_feed_forward.1']
    %10 = vsyncpa [#allocation3], 0
    %s11 = scalar_lea.sflag [#allocation3], 1
    %12 = vsyncpa %s11, 0
    loop: start=0, step=1, limit=4
    $region2: #{positionwise_feed_forward.1} parent=1 // loop_pre_header
      _
    $region3: #{positionwise_feed_forward.1} parent=1 // loop_header
      %s14 = sphi 0, %s18
      %p15 = scmp.ge.s32.totalorder %s14, 4
      %s21 = sphi 0, %s33
      %s22 = sphi 0, %s29
      %s23 = sphi 0, %s21
      %s24 = sphi 0, %s22
      %s25 = sphi 0, %s23
      %s26 = sphi 0, %s24
      %s36 = sphi 0, %s38
      %s39 = sphi 0, %s36
      %s40 = sphi 0, %s39
      %s56 = sphi 0, %s40
      %s62 = sphi 0, %s64
      %s65 = sphi 0, %s62
      %s66 = sphi 0, %s65
      %s82 = sphi 0, %s66
      %s88 = sphi 0, %s90
      %s91 = sphi 0, %s88
      %s92 = sphi 0, %s91
      %s108 = sphi 0, %s92
      %s114 = sphi 0, %s116
      %s117 = sphi 0, %s114
      %s118 = sphi 0, %s117
      %s134 = sphi 0, %s118
      %s138 = sphi 0, %s138
      %s140 = sphi 0, %s138
      %s141 = sphi 0, %s140
      %s155 = sphi 0, %s141
      %s161 = sphi 0, %s163
      %s164 = sphi 0, %s161
      %s165 = sphi 0, %s164
      %s181 = sphi 0, %s165
    $region4: #{positionwise_feed_forward.1} parent=1 // loop_header_branch
      %17 = sbr.rel (%p15) target = $region8
    $region5: #{positionwise_feed_forward.1} parent=1 // loop_body
      %s19 = ssub.s32 %s14, 1
      %s20 = ssub.s32 %s14, 2
      %s27 = sadd.s32 1, %s22
      %p28 = scmp.ge.s32.totalorder %s27, 1
      %s29 = scalar_select %p28, 0, %s27
      %s30 = sadd.s32 1, %s21
      %s31 = scalar_select %p28, %s30, %s21
      %p32 = scmp.ge.s32.totalorder %s31, 2
      %s33 = scalar_select %p32, 0, %s31
      %s34 = ssub.s32 %s21, %s33
      %p35 = scmp.eq.s32.totalorder %s34, 0
      %s37 = sadd.s32 %s36, 1
      %s38 = scalar_select %p35, %s36, %s37
      %p41 = pneg %p35
      %p42 = scmp.eq.s32.totalorder %s14, 1
      %p43 = por %p41, %p42
      %p44 = scmp.ne.s32.totalorder %s36, %s39
      %p45 = scmp.eq.s32.totalorder %s14, 0
      %p46 = por %p44, %p45
      %p47 = scmp.ne.s32.totalorder %s36, %s39
      %p48 = scmp.eq.s32.totalorder %s19, 1
      %p49 = por %p47, %p48
      %p50 = scmp.ne.s32.totalorder %s39, %s40
      %p51 = scmp.eq.s32.totalorder %s19, 0
      %p52 = por %p50, %p51
      %p53 = scmp.ne.s32.totalorder %s39, %s40
      %p54 = scmp.eq.s32.totalorder %s20, 1
      %p55 = por %p53, %p54
      %p57 = scmp.ne.s32.totalorder %s40, %s56
      %p58 = scmp.eq.s32.totalorder %s20, 0
      %p59 = por %p57, %p58
      %s60 = ssub.s32 %s22, %s29
      %p61 = scmp.eq.s32.totalorder %s60, 0
      %s63 = sadd.s32 %s62, 1
      %s64 = scalar_select %p61, %s62, %s63
      %p67 = pneg %p61
      %p68 = scmp.eq.s32.totalorder %s14, 1
      %p69 = por %p67, %p68
      %p70 = scmp.ne.s32.totalorder %s62, %s65
      %p71 = scmp.eq.s32.totalorder %s14, 0
      %p72 = por %p70, %p71
      %p73 = scmp.ne.s32.totalorder %s62, %s65
      %p74 = scmp.eq.s32.totalorder %s19, 1
      %p75 = por %p73, %p74
      %p76 = scmp.ne.s32.totalorder %s65, %s66
      %p77 = scmp.eq.s32.totalorder %s19, 0
      %p78 = por %p76, %p77
      %p79 = scmp.ne.s32.totalorder %s65, %s66
      %p80 = scmp.eq.s32.totalorder %s20, 1
      %p81 = por %p79, %p80
      %p83 = scmp.ne.s32.totalorder %s66, %s82
      %p84 = scmp.eq.s32.totalorder %s20, 0
      %p85 = por %p83, %p84
      %s86 = ssub.s32 %s22, %s29
      %p87 = scmp.eq.s32.totalorder %s86, 0
      %s89 = sadd.s32 %s88, 1
      %s90 = scalar_select %p87, %s88, %s89
      %p93 = pneg %p87
      %p94 = scmp.eq.s32.totalorder %s14, 1
      %p95 = por %p93, %p94
      %p96 = scmp.ne.s32.totalorder %s88, %s91
      %p97 = scmp.eq.s32.totalorder %s14, 0
      %p98 = por %p96, %p97
      %p99 = scmp.ne.s32.totalorder %s88, %s91
      %p100 = scmp.eq.s32.totalorder %s19, 1
      %p101 = por %p99, %p100
      %p102 = scmp.ne.s32.totalorder %s91, %s92
      %p103 = scmp.eq.s32.totalorder %s19, 0
      %p104 = por %p102, %p103
      %p105 = scmp.ne.s32.totalorder %s91, %s92
      %p106 = scmp.eq.s32.totalorder %s20, 1
      %p107 = por %p105, %p106
      %p109 = scmp.ne.s32.totalorder %s92, %s108
      %p110 = scmp.eq.s32.totalorder %s20, 0
      %p111 = por %p109, %p110
      %s112 = ssub.s32 %s22, %s29
      %p113 = scmp.eq.s32.totalorder %s112, 0
      %s115 = sadd.s32 %s114, 1
      %s116 = scalar_select %p113, %s114, %s115
      %p119 = pneg %p113
      %p120 = scmp.eq.s32.totalorder %s14, 1
      %p121 = por %p119, %p120
      %p122 = scmp.ne.s32.totalorder %s114, %s117
      %p123 = scmp.eq.s32.totalorder %s14, 0
      %p124 = por %p122, %p123
      %p125 = scmp.ne.s32.totalorder %s114, %s117
      %p126 = scmp.eq.s32.totalorder %s19, 1
      %p127 = por %p125, %p126
      %p128 = scmp.ne.s32.totalorder %s117, %s118
      %p129 = scmp.eq.s32.totalorder %s19, 0
      %p130 = por %p128, %p129
      %p131 = scmp.ne.s32.totalorder %s117, %s118
      %p132 = scmp.eq.s32.totalorder %s20, 1
      %p133 = por %p131, %p132
      %p135 = scmp.ne.s32.totalorder %s118, %s134
      %p136 = scmp.eq.s32.totalorder %s20, 0
      %p137 = por %p135, %p136
      %s139 = sadd.s32 %s138, 1
      %p142 = scmp.eq.s32.totalorder %s14, 1
      %p143 = scmp.ne.s32.totalorder %s138, %s140
      %p144 = scmp.eq.s32.totalorder %s14, 0
      %p145 = por %p143, %p144
      %p146 = scmp.ne.s32.totalorder %s138, %s140
      %p147 = scmp.eq.s32.totalorder %s19, 1
      %p148 = por %p146, %p147
      %p149 = scmp.ne.s32.totalorder %s140, %s141
      %p150 = scmp.eq.s32.totalorder %s19, 0
      %p151 = por %p149, %p150
      %p152 = scmp.ne.s32.totalorder %s140, %s141
      %p153 = scmp.eq.s32.totalorder %s20, 1
      %p154 = por %p152, %p153
      %p156 = scmp.ne.s32.totalorder %s141, %s155
      %p157 = scmp.eq.s32.totalorder %s20, 0
      %p158 = por %p156, %p157
      %s159 = ssub.s32 %s21, %s33
      %p160 = scmp.eq.s32.totalorder %s159, 0
      %s162 = sadd.s32 %s161, 1
      %s163 = scalar_select %p160, %s161, %s162
      %p166 = pneg %p160
      %p167 = scmp.eq.s32.totalorder %s14, 1
      %p168 = por %p166, %p167
      %p169 = scmp.ne.s32.totalorder %s161, %s164
      %p170 = scmp.eq.s32.totalorder %s14, 0
      %p171 = por %p169, %p170
      %p172 = scmp.ne.s32.totalorder %s161, %s164
      %p173 = scmp.eq.s32.totalorder %s19, 1
      %p174 = por %p172, %p173
      %p175 = scmp.ne.s32.totalorder %s164, %s165
      %p176 = scmp.eq.s32.totalorder %s19, 0
      %p177 = por %p175, %p176
      %p178 = scmp.ne.s32.totalorder %s164, %s165
      %p179 = scmp.eq.s32.totalorder %s20, 1
      %p180 = por %p178, %p179
      %p182 = scmp.ne.s32.totalorder %s165, %s181
      %p183 = scmp.eq.s32.totalorder %s20, 0
      %p184 = por %p182, %p183
      %p185 = scmp.le.s32.totalorder 1, %s14
      %p186 = scmp.lt.s32.totalorder %s14, 3
      %p187 = pnand %p185, %p186
      %p188 = pneg %p187
      // Predicated region
      $region9: #{positionwise_feed_forward.1} parent=5 // pred_check
        _
      $region10: #{positionwise_feed_forward.1} parent=5 // pred_check_branch
        %190 = sbr.rel (%p187) target = $region12
      $region11: #{positionwise_feed_forward.1} parent=5 // pred_region
        %s191 = ssub.s32 %s14, 1
        // Predicated region
        $region13: #{positionwise_feed_forward.1} parent=11 // pred_check
          %p192 = pneg %p78
        $region14: #{positionwise_feed_forward.1} parent=11 // pred_check_branch
          %194 = sbr.rel (%p192) target = $region16
        $region15: #{positionwise_feed_forward.1} parent=11 // pred_region
          %p195 = scmp.lt.s32.totalorder %s24, 0
          %s196 = scalar_select %p195, %s24, 0
          %s197 = smul.addr %s196, 8
          %s198 = scalar_lea.vmem %s1, %s197
        $region16: #{positionwise_feed_forward.1} parent=11 // pred_fallthru
          _
        // Predicated region
        $region17: #{positionwise_feed_forward.1} parent=11 // pred_check
          %p199 = pneg %p104
        $region18: #{positionwise_feed_forward.1} parent=11 // pred_check_branch
          %201 = sbr.rel (%p199) target = $region20
        $region19: #{positionwise_feed_forward.1} parent=11 // pred_region
          %p202 = scmp.lt.s32.totalorder %s24, 0
          %s203 = scalar_select %p202, %s24, 0
          %s204 = scalar_lea.vmem %s2, %s203
        $region20: #{positionwise_feed_forward.1} parent=11 // pred_fallthru
          _
        // Predicated region
        $region21: #{positionwise_feed_forward.1} parent=11 // pred_check
          %p205 = pneg %p130
        $region22: #{positionwise_feed_forward.1} parent=11 // pred_check_branch
          %207 = sbr.rel (%p205) target = $region24
        $region23: #{positionwise_feed_forward.1} parent=11 // pred_region
          %s208 = smul.u32 16, %s24
          %p209 = scmp.lt.s32.totalorder %s208, 15
          %s210 = scalar_select %p209, %s208, 15
          %s211 = smul.addr %s210, 8
          %s212 = scalar_lea.vmem %s3, %s211
          %s213 = smul.u32 16, %s24
        $region24: #{positionwise_feed_forward.1} parent=11 // pred_fallthru
          _
        // Predicated region
        $region25: #{positionwise_feed_forward.1} parent=11 // pred_check
          %p214 = pneg %p151
        $region26: #{positionwise_feed_forward.1} parent=11 // pred_check_branch
          %216 = sbr.rel (%p214) target = $region28
        $region27: #{positionwise_feed_forward.1} parent=11 // pred_region
          _
        $region28: #{positionwise_feed_forward.1} parent=11 // pred_fallthru
          _
      $region12: #{positionwise_feed_forward.1} parent=5 // pred_fallthru
        _
      %p217 = scmp.lt.s32.totalorder %s14, 2
      // Predicated region
      $region29: #{positionwise_feed_forward.1} parent=5 // pred_check
        %p218 = pneg %p217
      $region30: #{positionwise_feed_forward.1} parent=5 // pred_check_branch
        %220 = sbr.rel (%p218) target = $region32
      $region31: #{positionwise_feed_forward.1} parent=5 // pred_region
        // Predicated region
        $region33: #{positionwise_feed_forward.1} parent=31 // pred_check
          %p221 = pneg %p46
        $region34: #{positionwise_feed_forward.1} parent=31 // pred_check_branch
          %223 = sbr.rel (%p221) target = $region36
        $region35: #{positionwise_feed_forward.1} parent=31 // pred_region
          %p224 = scmp.lt.s32.totalorder %s21, 1
          %s225 = scalar_select %p224, %s21, 1
          %s226 = smul.addr %s225, 8
          %s227 = scalar_lea.vmem %s0, %s226
        $region36: #{positionwise_feed_forward.1} parent=31 // pred_fallthru
          _
      $region32: #{positionwise_feed_forward.1} parent=5 // pred_fallthru
        _
      %p228 = scmp.le.s32.totalorder 1, %s14
      %p229 = scmp.lt.s32.totalorder %s14, 3
      %p230 = pnand %p228, %p229
      %p231 = pneg %p230
      // Predicated region
      $region37: #{positionwise_feed_forward.1} parent=5 // pred_check
        _
      $region38: #{positionwise_feed_forward.1} parent=5 // pred_check_branch
        %233 = sbr.rel (%p230) target = $region40
      $region39: #{positionwise_feed_forward.1} parent=5 // pred_region
        %s234 = ssub.s32 %s14, 1
        %p235 = scmp.lt.s32.totalorder %s23, 1
        %s236 = scalar_select %p235, %s23, 1
        %s237 = smul.addr %s236, 8
        %s238 = scalar_lea.vmem %s0, %s237
        %p239 = pneg %p52
        %p240 = pneg %p49
        %p241 = scmp.lt.s32.totalorder %s24, 0
        %s242 = scalar_select %p241, %s24, 0
        %s243 = smul.addr %s242, 8
        %s244 = scalar_lea.vmem %s1, %s243
        %p245 = pneg %p78
        %p246 = pneg %p75
        %p247 = scmp.lt.s32.totalorder %s24, 0
        %s248 = scalar_select %p247, %s24, 0
        %s249 = scalar_lea.vmem %s2, %s248
        %p250 = pneg %p104
        %p251 = pneg %p101
        %s252 = smul.u32 16, %s24
        %p253 = scmp.lt.s32.totalorder %s252, 15
        %s254 = scalar_select %p253, %s252, 15
        %s255 = smul.addr %s254, 8
        %s256 = scalar_lea.vmem %s3, %s255
        %p257 = pneg %p130
        %p258 = pneg %p127
        %p259 = pneg %p151
        %p260 = pneg %p148
        %p261 = pneg %p177
        %p262 = pneg %p174
        %s263 = sand.u32 %s164, 1
        %s264 = scalar_lea.sflag [#allocation3], %s263
        %s265 = sand.u32 %s164, 1
        %s266 = smul.addr %s265, 8
        %s267 = scalar_lea.vmem [#allocation2], %s266
        %p268 = scmp.lt.s32.totalorder %s23, 1
        %s269 = scalar_select %p268, %s23, 1
        %s270 = smul.addr %s269, 8
        %s271 = scalar_lea.vmem %s0, %s270
        %p272 = scmp.lt.s32.totalorder %s24, 0
        %s273 = scalar_select %p272, %s24, 0
        %s274 = smul.addr %s273, 8
        %s275 = scalar_lea.vmem %s1, %s274
        %p276 = scmp.lt.s32.totalorder %s24, 0
        %s277 = scalar_select %p276, %s24, 0
        %s278 = scalar_lea.vmem %s2, %s277
        %s279 = smul.u32 16, %s24
        %p280 = scmp.lt.s32.totalorder %s279, 15
        %s281 = scalar_select %p280, %s279, 15
        %s282 = smul.addr %s281, 8
        %s283 = scalar_lea.vmem %s3, %s282
        %s284 = smul.u32 16, %s24
        %p285 = scmp.eq.s32.totalorder %s24, 0
        // Predicated region
        $region41: #{positionwise_feed_forward.1} parent=39 // pred_check
          %p286 = pneg %p285
        $region42: #{positionwise_feed_forward.1} parent=39 // pred_check_branch
          %288 = sbr.rel (%p286) target = $region44
        $region43: #{positionwise_feed_forward.1} parent=39 // pred_region
          %v289 = vld [vmem:[%s4] sm:$0x1]
          %v291 = vlaneseq
          %v292 = vshrl.u32 %v291, 7
          %v293 = vsub.s32 0, %v292
          %v294 = vrot.slane %v289, %v293
          %vm296 = vcmask 261120
          %297 = vst.msk [vmem:[%s267] sm:$0xff] %vm296, %v294
        $region44: #{positionwise_feed_forward.1} parent=39 // pred_fallthru
          _
        %v298 = vld [vmem:[%s271] sm:$0xff]
        %v299 = vld [vmem:[%s275] sm:$0xff]
        %v300 = vld [vmem:[%s275 + $0x8] sm:$0xff]
        %v301 = vld [vmem:[%s275 + $0x10] sm:$0xff]
        %v302 = vld [vmem:[%s275 + $0x18] sm:$0xff]
        %v303 = vld [vmem:[%s278] sm:$0x1]
        %v305 = vlaneseq
        %v306 = vshrl.u32 %v305, 7
        %v307 = vsub.s32 0, %v306
        %v308 = vrot.slane %v303, %v307
        %vm310 = vcmask 261120
        %v312 = vsel %vm310, %v298, 0
        %314 = vmatprep.subr.mxu0 0.0
        %315 = vmatpush1.msra.mxu0 %v299
        %316 = vmatprep.subr.mxu0 0.0
        %317 = vmatpush1.msra.mxu0 %v300
        %318 = vmatprep.subr.mxu0 0.0
        %319 = vmatpush1.msra.mxu0 %v301
        %320 = vmatprep.subr.mxu0 0.0
        %321 = vmatpush1.msra.mxu0 %v302
        %322 = vmatprep.subr.mxu0 0.0
        %323 = vmatpush1.msra.mxu0 0.0
        %324 = vmatprep.subr.mxu0 0.0
        %325 = vmatpush1.msra.mxu0 0.0
        %326 = vmatprep.subr.mxu0 0.0
        %327 = vmatpush1.msra.mxu0 0.0
        %328 = vmatprep.subr.mxu0 0.0
        %329 = vmatpush1.msra.mxu0 0.0
        %330 = vmatprep.subr.mxu0 0.0
        %331 = vmatpush1.msra.mxu0 0.0
        %332 = vmatprep.subr.mxu0 0.0
        %333 = vmatpush1.msra.mxu0 0.0
        %334 = vmatprep.subr.mxu0 0.0
        %335 = vmatpush1.msra.mxu0 0.0
        %336 = vmatprep.subr.mxu0 0.0
        %337 = vmatpush1.msra.mxu0 0.0
        %338 = vmatprep.subr.mxu0 0.0
        %339 = vmatpush1.msra.mxu0 0.0
        %340 = vmatprep.subr.mxu0 0.0
        %341 = vmatpush1.msra.mxu0 0.0
        %342 = vmatprep.subr.mxu0 0.0
        %343 = vmatpush1.msra.mxu0 0.0
        %344 = vmatprep.subr.mxu0 0.0
        %345 = vmatpush1.msra.mxu0 0.0
        %346 = vmatprep.subr.mxu0 0.0
        %347 = vmatpush1.msra.mxu0 0.0
        %348 = vmatprep.subr.mxu0 0.0
        %349 = vmatpush1.msra.mxu0 0.0
        %350 = vmatprep.subr.mxu0 0.0
        %351 = vmatpush1.msra.mxu0 0.0
        %352 = vmatprep.subr.mxu0 0.0
        %353 = vmatpush1.msra.mxu0 0.0
        %354 = vmatprep.subr.mxu0 0.0
        %355 = vmatpush1.msra.mxu0 0.0
        %356 = vmatprep.subr.mxu0 0.0
        %357 = vmatpush1.msra.mxu0 0.0
        %358 = vmatprep.subr.mxu0 0.0
        %359 = vmatpush1.msra.mxu0 0.0
        %360 = vmatprep.subr.mxu0 0.0
        %361 = vmatpush1.msra.mxu0 0.0
        %362 = vmatprep.subr.mxu0 0.0
        %363 = vmatpush1.msra.mxu0 0.0
        %364 = vmatprep.subr.mxu0 0.0
        %365 = vmatpush1.msra.mxu0 0.0
        %366 = vmatprep.subr.mxu0 0.0
        %367 = vmatpush1.msra.mxu0 0.0
        %368 = vmatprep.subr.mxu0 0.0
        %369 = vmatpush1.msra.mxu0 0.0
        %370 = vmatprep.subr.mxu0 0.0
        %371 = vmatpush1.msra.mxu0 0.0
        %372 = vmatprep.subr.mxu0 0.0
        %373 = vmatpush1.msra.mxu0 0.0
        %374 = vmatprep.subr.mxu0 0.0
        %375 = vmatpush1.msra.mxu0 0.0
        %376 = vmatprep.subr.mxu0 0.0
        %377 = vmatpush1.msra.mxu0 0.0
        %378 = vmatprep.mubr.f32.mxu0 0.0
        %379 = vmatmul.mubr.f32.gmra.mrb[0].mxu0 %v312
        %v380 = vpop.f32.mrb[0].mxu0
        %v381 = vadd.f32 %v308, %v380
        %v382 = vpop.f32.mrb[0].mxu0
        %383 = vdwg.mxu0
        %v384 = vmul.f32 %v381, 0.7978846
        %v385 = vmul.f32 %v381, %v381
        %v386 = vmul.f32 %v385, 0.044715
        %v387 = vadd.f32 %v386, 1.0
        %v388 = vmul.f32 %v384, %v387
        %v389 = vmul.f32 %v381, 0.5
        %v390 = vtanh.pop %v388
        %v391 = vadd.f32 %v390, 1.0
        %v392 = vmul.f32 %v389, %v391
        %v393 = vld [vmem:[%s267] sm:$0xff]
        %v394 = vld [vmem:[%s283] sm:$0xff]
        %v395 = vld [vmem:[%s283 + $0x8] sm:$0xff]
        %v396 = vld [vmem:[%s283 + $0x10] sm:$0xff]
        %v397 = vld [vmem:[%s283 + $0x18] sm:$0xff]
        %v398 = vld [vmem:[%s283 + $0x20] sm:$0xff]
        %v399 = vld [vmem:[%s283 + $0x28] sm:$0xff]
        %v400 = vld [vmem:[%s283 + $0x30] sm:$0xff]
        %v401 = vld [vmem:[%s283 + $0x38] sm:$0xff]
        %v402 = vld [vmem:[%s283 + $0x40] sm:$0xff]
        %v403 = vld [vmem:[%s283 + $0x48] sm:$0xff]
        %v404 = vld [vmem:[%s283 + $0x50] sm:$0xff]
        %v405 = vld [vmem:[%s283 + $0x58] sm:$0xff]
        %v406 = vld [vmem:[%s283 + $0x60] sm:$0xff]
        %v407 = vld [vmem:[%s283 + $0x68] sm:$0xff]
        %v408 = vld [vmem:[%s283 + $0x70] sm:$0xff]
        %v409 = vld [vmem:[%s283 + $0x78] sm:$0xff]
        %410 = vmatprep.subr.mxu0 0.0
        %411 = vmatpush1.msra.mxu0 %v394
        %412 = vmatprep.subr.mxu0 0.0
        %413 = vmatpush1.msra.mxu0 %v395
        %414 = vmatprep.subr.mxu0 0.0
        %415 = vmatpush1.msra.mxu0 %v396
        %416 = vmatprep.subr.mxu0 0.0
        %417 = vmatpush1.msra.mxu0 %v397
        %418 = vmatprep.subr.mxu0 0.0
        %419 = vmatpush1.msra.mxu0 %v398
        %420 = vmatprep.subr.mxu0 0.0
        %421 = vmatpush1.msra.mxu0 %v399
        %422 = vmatprep.subr.mxu0 0.0
        %423 = vmatpush1.msra.mxu0 %v400
        %424 = vmatprep.subr.mxu0 0.0
        %425 = vmatpush1.msra.mxu0 %v401
        %426 = vmatprep.subr.mxu0 0.0
        %427 = vmatpush1.msra.mxu0 %v402
        %428 = vmatprep.subr.mxu0 0.0
        %429 = vmatpush1.msra.mxu0 %v403
        %430 = vmatprep.subr.mxu0 0.0
        %431 = vmatpush1.msra.mxu0 %v404
        %432 = vmatprep.subr.mxu0 0.0
        %433 = vmatpush1.msra.mxu0 %v405
        %434 = vmatprep.subr.mxu0 0.0
        %435 = vmatpush1.msra.mxu0 %v406
        %436 = vmatprep.subr.mxu0 0.0
        %437 = vmatpush1.msra.mxu0 %v407
        %438 = vmatprep.subr.mxu0 0.0
        %439 = vmatpush1.msra.mxu0 %v408
        %440 = vmatprep.subr.mxu0 0.0
        %441 = vmatpush1.msra.mxu0 %v409
        %442 = vmatprep.subr.mxu0 0.0
        %443 = vmatpush1.msra.mxu0 0.0
        %444 = vmatprep.subr.mxu0 0.0
        %445 = vmatpush1.msra.mxu0 0.0
        %446 = vmatprep.subr.mxu0 0.0
        %447 = vmatpush1.msra.mxu0 0.0
        %448 = vmatprep.subr.mxu0 0.0
        %449 = vmatpush1.msra.mxu0 0.0
        %450 = vmatprep.subr.mxu0 0.0
        %451 = vmatpush1.msra.mxu0 0.0
        %452 = vmatprep.subr.mxu0 0.0
        %453 = vmatpush1.msra.mxu0 0.0
        %454 = vmatprep.subr.mxu0 0.0
        %455 = vmatpush1.msra.mxu0 0.0
        %456 = vmatprep.subr.mxu0 0.0
        %457 = vmatpush1.msra.mxu0 0.0
        %458 = vmatprep.subr.mxu0 0.0
        %459 = vmatpush1.msra.mxu0 0.0
        %460 = vmatprep.subr.mxu0 0.0
        %461 = vmatpush1.msra.mxu0 0.0
        %462 = vmatprep.subr.mxu0 0.0
        %463 = vmatpush1.msra.mxu0 0.0
        %464 = vmatprep.subr.mxu0 0.0
        %465 = vmatpush1.msra.mxu0 0.0
        %466 = vmatprep.subr.mxu0 0.0
        %467 = vmatpush1.msra.mxu0 0.0
        %468 = vmatprep.subr.mxu0 0.0
        %469 = vmatpush1.msra.mxu0 0.0
        %470 = vmatprep.subr.mxu0 0.0
        %471 = vmatpush1.msra.mxu0 0.0
        %472 = vmatprep.subr.mxu0 0.0
        %473 = vmatpush1.msra.mxu0 0.0
        %474 = vmatprep.mubr.f32.mxu0 0.0
        %475 = vmatmul.mubr.f32.gmra.mrb[0].mxu0 %v392
        %v476 = vpop.f32.mrb[0].mxu0
        %v477 = vadd.f32 0.0, %v476
        %v478 = vpop.f32.mrb[0].mxu0
        %479 = vdwg.mxu0
        %v480 = vadd.f32 %v393, %v477
        %481 = vst.msk [vmem:[%s267] sm:$0xff] %vm310, %v480
        %s482 = sand.u32 %s164, 1
        %s483 = scalar_lea.sflag [#allocation3], %s482
        %s484 = sand.u32 %s164, 1
        %s485 = smul.addr %s484, 8
        %s486 = scalar_lea.vmem [#allocation2], %s485
        // Predicated region
        $region45: #{positionwise_feed_forward.1} parent=39 // pred_check
          %p487 = pneg %p174
        $region46: #{positionwise_feed_forward.1} parent=39 // pred_check_branch
          %489 = sbr.rel (%p487) target = $region48
        $region47: #{positionwise_feed_forward.1} parent=39 // pred_region
          %s491 = ssub.s32 128, 128
          %492 = vsyncadd %s483, %s491
          %s493 = smul.addr %s23, 128
          %s494 = scalar_lea.hbm %s5, %s493
          %s496 = sshll.u32 %s486, 4
          %s497 = int_to_ptr.vmem [resolvable:$true] %s496
          %499 = dma.vmem_to_hbm [thread:$0]  %s497, 128, %s494, %s483
        $region48: #{positionwise_feed_forward.1} parent=39 // pred_fallthru
          _
      $region40: #{positionwise_feed_forward.1} parent=5 // pred_fallthru
        _
      %p500 = scmp.le.s32.totalorder 2, %s14
      // Predicated region
      $region49: #{positionwise_feed_forward.1} parent=5 // pred_check
        %p501 = pneg %p500
      $region50: #{positionwise_feed_forward.1} parent=5 // pred_check_branch
        %503 = sbr.rel (%p501) target = $region52
      $region51: #{positionwise_feed_forward.1} parent=5 // pred_region
        %s504 = ssub.s32 %s14, 2
        // Predicated region
        $region53: #{positionwise_feed_forward.1} parent=51 // pred_check
          %p505 = pneg %p180
        $region54: #{positionwise_feed_forward.1} parent=51 // pred_check_branch
          %507 = sbr.rel (%p505) target = $region56
        $region55: #{positionwise_feed_forward.1} parent=51 // pred_region
          %s508 = sand.u32 %s165, 1
          %s509 = scalar_lea.sflag [#allocation3], %s508
          %s510 = sand.u32 %s165, 1
          %s511 = smul.addr %s510, 8
          %s512 = scalar_lea.vmem [#allocation2], %s511
          %513 = dma.done %s509, 128
        $region56: #{positionwise_feed_forward.1} parent=51 // pred_fallthru
          _
      $region52: #{positionwise_feed_forward.1} parent=5 // pred_fallthru
        _
    $region6: #{positionwise_feed_forward.1} parent=1 // loop_footer
      %s18 = sadd.s32 1, %s14
    $region7: #{positionwise_feed_forward.1} parent=1 // loop_footer_branch
      %13 = sbr.rel target = $region3
    $region8: #{positionwise_feed_forward.1} parent=1 // loop_exit
      _
    %514 = vsyncpa [#allocation3], 1
    %s515 = scalar_lea.sflag [#allocation3], 1
    %516 = vsyncpa %s515, 1

</llo_original>
